<compile_context>
chip_gen: v5e
topology: v5e:2x2
jax: 0.10.0
libtpu: 0.0.40
codegen_flags: <defaults>
</compile_context>

<pallas_src>
import functools

import jax
import jax.numpy as jnp
from jax.experimental import pallas as pl
from jax.experimental.pallas import tpu as pltpu

LANE = 128


def _round_up(v, m):
    return (v + m - 1) // m * m


def _choose_row_tile(hout, wout, target_m=256):
    """Smallest divisor of hout whose strip gives M = rt*wout >= target_m."""
    for d in range(1, hout + 1):
        if hout % d == 0 and d * wout >= target_m:
            return d
    return hout


# ---------------------------------------------------------------------------
# Kernel: stride-1 conv (+ folded BN) [+ fused 1x1-shortcut second output]
#         [+ residual add] [+ ReLU], one output row strip per grid step.
# ---------------------------------------------------------------------------
def _fused_conv_kernel(x_ref, w_ref, scale_ref, bias_ref, *rest,
                       KH, KW, pad_lo, relu, has_shortcut, has_residual,
                       use_im2col):
    rest = list(rest)
    xs_ref = rest.pop()                       # halo scratch (last arg)
    if has_shortcut:
        wsc_ref, ssc_ref, bsc_ref = rest[:3]
        rest = rest[3:]
    if has_residual:
        res_ref = rest[0]
        rest = rest[1:]
    if has_shortcut:
        out_ref, outsc_ref = rest
    else:
        (out_ref,) = rest

    _, Hin, Win, Cin = x_ref.shape
    _, rt, Wout, Cp = out_ref.shape           # output row strip
    Hs, Ws, _ = xs_ref.shape
    M = rt * Wout
    cdt = w_ref.dtype                         # MXU operand dtype

    r = pl.program_id(1)

    # Build the zero-padded halo copy of this image once per batch item
    # (r == 0); later row strips of the same image reuse it (the row axis is
    # innermost and marked "arbitrary").  Only the halo frame is zeroed.
    @pl.when(r == 0)
    def _build_halo():
        zdt = xs_ref.dtype
        pad_hi_h = Hs - pad_lo - Hin
        pad_hi_w = Ws - pad_lo - Win
        if pad_lo > 0:
            xs_ref[:pad_lo, :, :] = jnp.zeros((pad_lo, Ws, Cin), zdt)
            xs_ref[:, :pad_lo, :] = jnp.zeros((Hs, pad_lo, Cin), zdt)
        if pad_hi_h > 0:
            xs_ref[Hs - pad_hi_h:, :, :] = jnp.zeros((pad_hi_h, Ws, Cin), zdt)
        if pad_hi_w > 0:
            xs_ref[:, Ws - pad_hi_w:, :] = jnp.zeros((Hs, pad_hi_w, Cin), zdt)
        xs_ref[pad_lo:pad_lo + Hin, pad_lo:pad_lo + Win, :] = x_ref[0]

    row0 = r * rt                             # first halo row of this strip

    def tap(kh, kw):
        # (rt, Wout, Cin) window for conv tap (kh, kw), cast to MXU dtype.
        return xs_ref[pl.ds(row0 + kh, rt), kw:kw + Wout, :].astype(cdt)

    taps = [(kh, kw) for kh in range(KH) for kw in range(KW)]

    if use_im2col:
        # Small per-tap Cin: fuse all taps into one MXU contraction.
        patches = jnp.concatenate([tap(kh, kw) for kh, kw in taps],
                                  axis=-1).reshape(M, KH * KW * Cin)
        acc = jnp.dot(patches, w_ref[...], preferred_element_type=jnp.float32)
        acc_sc = None
        if has_shortcut:
            acc_sc = jnp.dot(patches, wsc_ref[...],
                             preferred_element_type=jnp.float32)
    else:
        # Wide per-tap Cin (>= one MXU contraction pass each): accumulate
        # tap-by-tap; no im2col concat/reshape relayout.
        acc = None
        acc_sc = None
        for t, (kh, kw) in enumerate(taps):
            p = tap(kh, kw).reshape(M, Cin)
            d = jnp.dot(p, w_ref[t * Cin:(t + 1) * Cin, :],
                        preferred_element_type=jnp.float32)
            acc = d if acc is None else acc + d
            if has_shortcut:
                d_sc = jnp.dot(p, wsc_ref[t * Cin:(t + 1) * Cin, :],
                               preferred_element_type=jnp.float32)
                acc_sc = d_sc if acc_sc is None else acc_sc + d_sc

    y = acc * scale_ref[...] + bias_ref[...]            # folded BN (eval mode)
    if has_residual:
        C_res = res_ref.shape[-1]
        res = res_ref[0].astype(jnp.float32).reshape(M, C_res)
        if C_res < Cp:                                  # zero-extend lanes
            res = jnp.concatenate(
                [res, jnp.zeros((M, Cp - C_res), jnp.float32)], axis=-1)
        y = y + res
    if relu:
        y = jnp.maximum(y, 0.0)
    out_ref[0] = y.reshape(rt, Wout, Cp).astype(out_ref.dtype)

    if has_shortcut:
        y_sc = acc_sc * ssc_ref[...] + bsc_ref[...]
        outsc_ref[0] = y_sc.reshape(rt, Wout, Cp).astype(outsc_ref.dtype)


# ---------------------------------------------------------------------------
# pallas_call wrapper
# ---------------------------------------------------------------------------
def _vmem_limit_bytes(x, w_mat, scale, bias, shortcut, residual,
                      row_tile, Wout, cout_pad, Hs, Ws):
    N, Hin, Win, Cin = x.shape
    est = 2 * Hin * Win * Cin * x.dtype.itemsize            # x block (dbl-buf)
    est += Hs * Ws * Cin * x.dtype.itemsize                  # halo scratch
    est += 2 * (w_mat.size * w_mat.dtype.itemsize
                + scale.size * 4 + bias.size * 4)
    n_out = 1
    if shortcut is not None:
        wsc_mat, ssc, bsc = shortcut
        est += 2 * (wsc_mat.size * wsc_mat.dtype.itemsize
                    + ssc.size * 4 + bsc.size * 4)
        n_out = 2
    est += 2 * n_out * row_tile * Wout * cout_pad * x.dtype.itemsize
    if residual is not None:
        est += 2 * row_tile * Wout * residual.shape[-1] * residual.dtype.itemsize
    # headroom for in-kernel temporaries (im2col patches / f32 accumulators)
    est += 8 * row_tile * Wout * cout_pad * 4
    return int(min(max(2 * est, 32 << 20), 64 << 20))


def _fused_conv(x, w_mat, scale, bias, *, KH, KW, pad_lo, cout_pad, relu,
                shortcut=None, residual=None, row_tile=None):
    """x: (N, Hin, Win, Cin) NHWC.  Returns (out[, out_shortcut]), channels
    lane-padded to cout_pad, spatial size preserved ("same" conv)."""
    N, Hin, Win, Cin = x.shape
    Hout, Wout = Hin, Win
    Hs, Ws = Hout + KH - 1, Wout + KW - 1
    if row_tile is None:
        row_tile = _choose_row_tile(Hout, Wout)
    R = Hout // row_tile
    # im2col only when per-tap Cin is small (conv1); for wide inputs
    # (conv2: Cin == cout_pad) a per-tap dot already fills an MXU pass.
    use_im2col = Cin < LANE

    has_shortcut = shortcut is not None
    has_residual = residual is not None

    in_specs = [
        pl.BlockSpec((1, Hin, Win, Cin), lambda n, r: (n, 0, 0, 0)),
        pl.BlockSpec(w_mat.shape, lambda n, r: (0, 0)),
        pl.BlockSpec(scale.shape, lambda n, r: (0, 0)),
        pl.BlockSpec(bias.shape, lambda n, r: (0, 0)),
    ]
    args = [x, w_mat, scale, bias]
    if has_shortcut:
        wsc_mat, ssc, bsc = shortcut
        in_specs += [
            pl.BlockSpec(wsc_mat.shape, lambda n, r: (0, 0)),
            pl.BlockSpec(ssc.shape, lambda n, r: (0, 0)),
            pl.BlockSpec(bsc.shape, lambda n, r: (0, 0)),
        ]
        args += [wsc_mat, ssc, bsc]
    if has_residual:
        C_res = residual.shape[-1]
        in_specs.append(pl.BlockSpec((1, row_tile, Wout, C_res),
                                     lambda n, r: (n, r, 0, 0)))
        args.append(residual)

    out_shape = [jax.ShapeDtypeStruct((N, Hout, Wout, cout_pad), x.dtype)]
    out_specs = [pl.BlockSpec((1, row_tile, Wout, cout_pad),
                              lambda n, r: (n, r, 0, 0))]
    if has_shortcut:
        out_shape.append(jax.ShapeDtypeStruct((N, Hout, Wout, cout_pad),
                                              x.dtype))
        out_specs.append(pl.BlockSpec((1, row_tile, Wout, cout_pad),
                                      lambda n, r: (n, r, 0, 0)))

    kernel = functools.partial(
        _fused_conv_kernel, KH=KH, KW=KW, pad_lo=pad_lo, relu=relu,
        has_shortcut=has_shortcut, has_residual=has_residual,
        use_im2col=use_im2col)

    vmem_limit = _vmem_limit_bytes(x, w_mat, scale, bias, shortcut, residual,
                                   row_tile, Wout, cout_pad, Hs, Ws)

    return pl.pallas_call(
        kernel,
        out_shape=tuple(out_shape),
        grid=(N, R),
        in_specs=in_specs,
        out_specs=tuple(out_specs),
        scratch_shapes=[pltpu.VMEM((Hs, Ws, Cin), x.dtype)],
        compiler_params=pltpu.CompilerParams(
            # batch axis parallel; row-strip axis arbitrary (strips of one
            # image share the halo scratch built at r == 0).
            dimension_semantics=("parallel", "arbitrary"),
            vmem_limit_bytes=vmem_limit),
    )(*args)


# ---------------------------------------------------------------------------
# Wrapper-side layout transforms (weight/layout plumbing, done once)
# ---------------------------------------------------------------------------
def _pack_weight(w, cout_pad):
    """(KH,KW,Cin,Cout) HWIO -> (KH*KW*Cin, cout_pad) matmul matrix."""
    KH, KW, Cin, Cout = w.shape
    wp = jnp.zeros((KH, KW, Cin, cout_pad), w.dtype)
    wp = wp.at[:, :, :, :Cout].set(w)
    return wp.reshape(KH * KW * Cin, cout_pad)


def _pack_scale_bias(scale, bias, cout_pad):
    Cout = scale.shape[0]
    s = jnp.zeros((1, cout_pad), jnp.float32).at[0, :Cout].set(
        scale.astype(jnp.float32))
    b = jnp.zeros((1, cout_pad), jnp.float32).at[0, :Cout].set(
        bias.astype(jnp.float32))
    return s, b


def _space_to_depth(x):
    """(N,H,W,C) -> (N,H/2,W/2,4C); channel group g = 2*dy + dx."""
    N, H, W, C = x.shape
    assert H % 2 == 0 and W % 2 == 0, "space-to-depth needs even H, W"
    x = x.reshape(N, H // 2, 2, W // 2, 2, C)
    x = jnp.transpose(x, (0, 1, 3, 2, 4, 5))
    return x.reshape(N, H // 2, W // 2, 4 * C)


def _s2d_weights_3x3(w):
    """stride-2 3x3 conv (pad 1) -> stride-1 2x2 conv on space-to-depth input."""
    KH, KW, Cin, Cout = w.shape
    w2 = jnp.zeros((2, 2, 4 * Cin, Cout), w.dtype)
    for i in range(2):
        for j in range(2):
            for dy in range(2):
                for dx in range(2):
                    kh, kw = 2 * i + dy - 1, 2 * j + dx - 1
                    if 0 <= kh < KH and 0 <= kw < KW:
                        g = 2 * dy + dx
                        w2 = w2.at[i, j, g * Cin:(g + 1) * Cin, :].set(w[kh, kw])
    return w2


def _s2d_weights_1x1(w):
    """stride-2 1x1 conv (pad 0) -> stride-1 2x2 conv on space-to-depth input."""
    _, _, Cin, Cout = w.shape
    w2 = jnp.zeros((2, 2, 4 * Cin, Cout), w.dtype)
    return w2.at[1, 1, :Cin, :].set(w[0, 0])


def _embed_1x1_in_3x3(w):
    """1x1 stride-1 conv embedded as the centre tap of a 3x3 (shares taps)."""
    _, _, Cin, Cout = w.shape
    w3 = jnp.zeros((3, 3, Cin, Cout), w.dtype)
    return w3.at[1, 1].set(w[0, 0])


def fold_bn(gamma, beta, mean, var, eps=1e-5):
    scale = gamma / jnp.sqrt(var + eps)
    bias = beta - mean * scale
    return scale, bias


# ---------------------------------------------------------------------------
# BasicBlock forward: relu( bn2(conv2( relu(bn1(conv1(x))) )) + shortcut(x) )
# ---------------------------------------------------------------------------
def basic_block(x, w1, s1, b1, w2, s2, b2, *, stride=1,
                w_sc=None, s_sc=None, b_sc=None, compute_dtype=None):
    """NHWC activations, HWIO weights, eval-mode BN folded into (scale, bias).

    compute_dtype: dtype of the MXU operands (weights are pre-cast; activation
    taps are cast right before each dot); accumulation stays f32.  Pass
    jnp.bfloat16 on v6e/v7x for peak MXU rate; default x.dtype keeps the
    PyTorch f32 numerics.
    """
    N, H, W, Cin = x.shape
    planes = w1.shape[-1]
    cout_pad = _round_up(planes, LANE)
    cdt = compute_dtype if compute_dtype is not None else x.dtype

    if w_sc is None:
        # PyTorch BasicBlock only uses the identity shortcut in this config.
        assert stride == 1 and Cin == planes, (
            "identity shortcut requires stride == 1 and in_planes == planes")

    if stride == 1:
        x_in, w1_t = x, w1
        wsc_t = None if w_sc is None else _embed_1x1_in_3x3(w_sc)
        KH = KW = 3
    elif stride == 2:
        # stride-2 conv == stride-1 conv on a space-to-depth input with
        # rearranged weights (keeps all in-kernel indexing unit-stride).
        x_in = _space_to_depth(x)
        w1_t = _s2d_weights_3x3(w1)
        wsc_t = None if w_sc is None else _s2d_weights_1x1(w_sc)
        KH = KW = 2
    else:
        raise NotImplementedError("stride must be 1 or 2")
    pad_lo = 1

    w1_mat = _pack_weight(w1_t, cout_pad).astype(cdt)
    s1p, b1p = _pack_scale_bias(s1, b1, cout_pad)

    shortcut_pack = None
    if w_sc is not None:
        wsc_mat = _pack_weight(wsc_t, cout_pad).astype(cdt)
        sscp, bscp = _pack_scale_bias(s_sc, b_sc, cout_pad)
        shortcut_pack = (wsc_mat, sscp, bscp)

    # conv1 + bn1 + relu  (+ fused 1x1 shortcut: x read from HBM once).
    conv1_out = _fused_conv(x_in, w1_mat, s1p, b1p, KH=KH, KW=KW,
                            pad_lo=pad_lo, cout_pad=cout_pad, relu=True,
                            shortcut=shortcut_pack)
    if w_sc is not None:
        out1, shortcut_res = conv1_out
    else:
        out1 = conv1_out[0]
        shortcut_res = x   # identity; zero-extended to cout_pad inside conv2

    # conv2 weights: per-tap K padded to cout_pad so it matches out1's
    # lane-padded channels.  The padded rows hit channels that are exactly
    # zero, and K <= next multiple of 128 never adds an MXU contraction pass,
    # so (unlike the old 9*cout_pad im2col K) this costs nothing and avoids a
    # sub-128 lane slice of out1 per tap.
    KH2, KW2, Cin2, Cout2 = w2.shape
    w2_k = jnp.zeros((KH2, KW2, cout_pad, Cout2), w2.dtype)
    w2_k = w2_k.at[:, :, :Cin2, :].set(w2)
    w2_mat = _pack_weight(w2_k, cout_pad).astype(cdt)
    s2p, b2p = _pack_scale_bias(s2, b2, cout_pad)

    # conv2 + bn2 + residual add + relu.
    out = _fused_conv(out1, w2_mat, s2p, b2p, KH=3, KW=3, pad_lo=1,
                      cout_pad=cout_pad, relu=True, residual=shortcut_res)[0]
    return out[..., :planes]


# ---------------------------------------------------------------------------
if __name__ == "__main__":
    key = jax.random.PRNGKey(0)

    def bn_params(k, c):
        k1, k2, k3, k4 = jax.random.split(k, 4)
        gamma = 1.0 + 0.1 * jax.random.normal(k1, (c,), jnp.float32)
        beta = 0.1 * jax.random.normal(k2, (c,), jnp.float32)
        mean = 0.1 * jax.random.normal(k3, (c,), jnp.float32)
        var = 1.0 + 0.1 * jax.random.uniform(k4, (c,), jnp.float32)
        return fold_bn(gamma, beta, mean, var)

    def conv_bn_ref(xx, w, s, b, st, relu, residual=None):
        pad = (w.shape[0] - 1) // 2
        y = jax.lax.conv_general_dilated(
            xx, w, window_strides=(st, st),
            padding=((pad, pad), (pad, pad)),
            dimension_numbers=("NHWC", "HWIO", "NHWC"))
        y = y * s + b
        if residual is not None:
            y = y + residual
        if relu:
            y = jnp.maximum(y, 0.0)
        return y

    to_hwio = lambda w: jnp.transpose(w, (2, 3, 1, 0))   # OIHW -> HWIO

    # --- Test A: stride-2 block with 1x1-conv downsample shortcut -----------
    N, in_planes, H, W = 2, 4, 16, 16
    planes, stride = 8, 2
    keys = jax.random.split(key, 8)
    x = jnp.transpose(
        jax.random.normal(keys[0], (N, in_planes, H, W), jnp.float32),
        (0, 2, 3, 1))                                    # NCHW -> NHWC
    w1 = to_hwio(0.2 * jax.random.normal(keys[1], (planes, in_planes, 3, 3),
                                         jnp.float32))
    w2 = to_hwio(0.2 * jax.random.normal(keys[2], (planes, planes, 3, 3),
                                         jnp.float32))
    wsc = to_hwio(0.2 * jax.random.normal(keys[3], (planes, in_planes, 1, 1),
                                          jnp.float32))
    s1, b1 = bn_params(keys[4], planes)
    s2, b2 = bn_params(keys[5], planes)
    ssc, bsc = bn_params(keys[6], planes)

    out = jax.block_until_ready(
        basic_block(x, w1, s1, b1, w2, s2, b2, stride=stride,
                    w_sc=wsc, s_sc=ssc, b_sc=bsc))
    r1 = conv_bn_ref(x, w1, s1, b1, stride, True)
    rs = conv_bn_ref(x, wsc, ssc, bsc, stride, False)
    ref = conv_bn_ref(r1, w2, s2, b2, 1, True, residual=rs)
    assert out.shape == ref.shape, (out.shape, ref.shape)
    err_a = float(jnp.max(jnp.abs(out - ref)))
    assert err_a < 1e-3, f"stride-2 block: max abs error {err_a}"

    # --- Test A': same block with bf16 MXU operands (f32 accumulate) --------
    out_bf16 = jax.block_until_ready(
        basic_block(x, w1, s1, b1, w2, s2, b2, stride=stride,
                    w_sc=wsc, s_sc=ssc, b_sc=bsc,
                    compute_dtype=jnp.bfloat16))
    err_b = float(jnp.max(jnp.abs(out_bf16 - ref)))
    assert err_b < 1.0, f"bf16 compute path: max abs error {err_b}"

    # --- Test B: stride-1 block, identity shortcut, multi-strip row grid ----
    N2, planes2, H2, W2 = 2, 8, 32, 32
    keys2 = jax.random.split(keys[7], 6)
    x2 = jax.random.normal(keys2[0], (N2, H2, W2, planes2), jnp.float32)
    w1b = to_hwio(0.2 * jax.random.normal(keys2[1], (planes2, planes2, 3, 3),
                                          jnp.float32))
    w2b = to_hwio(0.2 * jax.random.normal(keys2[2], (planes2, planes2, 3, 3),
                                          jnp.float32))
    s1b, b1b = bn_params(keys2[3], planes2)
    s2b, b2b = bn_params(keys2[4], planes2)

    out2 = jax.block_until_ready(
        basic_block(x2, w1b, s1b, b1b, w2b, s2b, b2b, stride=1))
    r1b = conv_bn_ref(x2, w1b, s1b, b1b, 1, True)
    ref2 = conv_bn_ref(r1b, w2b, s2b, b2b, 1, True, residual=x2)
    assert out2.shape == ref2.shape, (out2.shape, ref2.shape)
    err_c = float(jnp.max(jnp.abs(out2 - ref2)))
    assert err_c < 1e-3, f"stride-1 block: max abs error {err_c}"

    print("KERNEL_OK")
</pallas_src>

<mosaic_0001>
module attributes {stable_mosaic.version = 11 : i64} {
  func.func @_fused_conv_kernel(%arg0: i32, %arg1: i32, %arg2: memref<1x8x8x16xf32, #tpu.memory_space<vmem>>, %arg3: memref<64x128xf32, #tpu.memory_space<vmem>>, %arg4: memref<1x128xf32, #tpu.memory_space<vmem>>, %arg5: memref<1x128xf32, #tpu.memory_space<vmem>>, %arg6: memref<64x128xf32, #tpu.memory_space<vmem>>, %arg7: memref<1x128xf32, #tpu.memory_space<vmem>>, %arg8: memref<1x128xf32, #tpu.memory_space<vmem>>, %arg9: memref<1x8x8x128xf32, #tpu.memory_space<vmem>>, %arg10: memref<1x8x8x128xf32, #tpu.memory_space<vmem>>, %arg11: memref<9x9x16xf32, #tpu.memory_space<vmem>>) attributes {dimension_semantics = [#tpu.dimension_semantics<parallel>, #tpu.dimension_semantics<arbitrary>], iteration_bounds = array<i64: 2, 1>, scalar_prefetch = 0 : i64, scratch_operands = 1 : i64, tpu.core_type = #tpu.core_type<tc>, window_params = [{transform_indices = @transform_0, window_bounds = array<i64: 1, 8, 8, 16>}, {pipeline_mode = #tpu.pipeline_mode<synchronous>, transform_indices = @transform_1, window_bounds = array<i64: 64, 128>}, {pipeline_mode = #tpu.pipeline_mode<synchronous>, transform_indices = @transform_2, window_bounds = array<i64: 1, 128>}, {pipeline_mode = #tpu.pipeline_mode<synchronous>, transform_indices = @transform_3, window_bounds = array<i64: 1, 128>}, {pipeline_mode = #tpu.pipeline_mode<synchronous>, transform_indices = @transform_4, window_bounds = array<i64: 64, 128>}, {pipeline_mode = #tpu.pipeline_mode<synchronous>, transform_indices = @transform_5, window_bounds = array<i64: 1, 128>}, {pipeline_mode = #tpu.pipeline_mode<synchronous>, transform_indices = @transform_6, window_bounds = array<i64: 1, 128>}, {transform_indices = @transform_7, window_bounds = array<i64: 1, 8, 8, 128>}, {transform_indices = @transform_8, window_bounds = array<i64: 1, 8, 8, 128>}]} {
    %c0_i32 = arith.constant 0 : i32
    %0 = arith.cmpi eq, %arg1, %c0_i32 : i32
    %1 = arith.extui %0 : i1 to i32
    %c0_i32_0 = arith.constant 0 : i32
    %2 = arith.cmpi ne, %1, %c0_i32_0 : i32
    scf.if %2 {
      %cst_32 = arith.constant 0.000000e+00 : f32
      %44 = vector.broadcast %cst_32 : f32 to vector<1x9x16xf32>
      %c0_33 = arith.constant 0 : index
      %c0_34 = arith.constant 0 : index
      %c0_35 = arith.constant 0 : index
      %45 = vector.load %arg11[%c0_33, %c0_34, %c0_35] : memref<9x9x16xf32, #tpu.memory_space<vmem>>, vector<1x9x16xf32>
      tpu.vector_store %arg11[%c0_33, %c0_34, %c0_35], %44 {strides = array<i32>} : memref<9x9x16xf32, #tpu.memory_space<vmem>>, vector<1x9x16xf32>,
      %cst_36 = arith.constant 0.000000e+00 : f32
      %46 = vector.broadcast %cst_36 : f32 to vector<9x1x16xf32>
      %c0_37 = arith.constant 0 : index
      %c0_38 = arith.constant 0 : index
      %c0_39 = arith.constant 0 : index
      %47 = vector.load %arg11[%c0_37, %c0_38, %c0_39] : memref<9x9x16xf32, #tpu.memory_space<vmem>>, vector<9x1x16xf32>
      tpu.vector_store %arg11[%c0_37, %c0_38, %c0_39], %46 {strides = array<i32>} : memref<9x9x16xf32, #tpu.memory_space<vmem>>, vector<9x1x16xf32>,
      %c0_40 = arith.constant 0 : index
      %c0_41 = arith.constant 0 : index
      %c0_42 = arith.constant 0 : index
      %c0_43 = arith.constant 0 : index
      %48 = vector.load %arg2[%c0_40, %c0_41, %c0_42, %c0_43] : memref<1x8x8x16xf32, #tpu.memory_space<vmem>>, vector<1x8x8x16xf32>
      %49 = vector.shape_cast %48 : vector<1x8x8x16xf32> to vector<8x8x16xf32>
      %c1_44 = arith.constant 1 : index
      %c1_45 = arith.constant 1 : index
      %c0_46 = arith.constant 0 : index
      %50 = vector.load %arg11[%c1_44, %c1_45, %c0_46] : memref<9x9x16xf32, #tpu.memory_space<vmem>>, vector<8x8x16xf32>
      tpu.vector_store %arg11[%c1_44, %c1_45, %c0_46], %49 {strides = array<i32>} : memref<9x9x16xf32, #tpu.memory_space<vmem>>, vector<8x8x16xf32>,
    } else {
    }
    %c8_i32 = arith.constant 8 : i32
    %3 = arith.muli %arg1, %c8_i32 : i32
    %c0_i32_1 = arith.constant 0 : i32
    %4 = arith.addi %3, %c0_i32_1 : i32
    %5 = arith.index_cast %4 : i32 to index
    %c0 = arith.constant 0 : index
    %c0_2 = arith.constant 0 : index
    %6 = vector.load %arg11[%5, %c0, %c0_2] : memref<9x9x16xf32, #tpu.memory_space<vmem>>, vector<8x8x16xf32>
    %c0_i32_3 = arith.constant 0 : i32
    %7 = arith.addi %3, %c0_i32_3 : i32
    %8 = arith.index_cast %7 : i32 to index
    %c1 = arith.constant 1 : index
    %c0_4 = arith.constant 0 : index
    %9 = vector.load %arg11[%8, %c1, %c0_4] : memref<9x9x16xf32, #tpu.memory_space<vmem>>, vector<8x8x16xf32>
    %c1_i32 = arith.constant 1 : i32
    %10 = arith.addi %3, %c1_i32 : i32
    %11 = arith.index_cast %10 : i32 to index
    %c0_5 = arith.constant 0 : index
    %c0_6 = arith.constant 0 : index
    %12 = vector.load %arg11[%11, %c0_5, %c0_6] : memref<9x9x16xf32, #tpu.memory_space<vmem>>, vector<8x8x16xf32>
    %c1_i32_7 = arith.constant 1 : i32
    %13 = arith.addi %3, %c1_i32_7 : i32
    %14 = arith.index_cast %13 : i32 to index
    %c1_8 = arith.constant 1 : index
    %c0_9 = arith.constant 0 : index
    %15 = vector.load %arg11[%14, %c1_8, %c0_9] : memref<9x9x16xf32, #tpu.memory_space<vmem>>, vector<8x8x16xf32>
    %16 = tpu.concatenate %6, %9, %12, %15 in 2 : vector<8x8x16xf32>, vector<8x8x16xf32>, vector<8x8x16xf32>, vector<8x8x16xf32> -> vector<8x8x64xf32>
    %17 = vector.shape_cast %16 : vector<8x8x64xf32> to vector<64x64xf32>
    %c0_10 = arith.constant 0 : index
    %c0_11 = arith.constant 0 : index
    %18 = vector.load %arg3[%c0_10, %c0_11] : memref<64x128xf32, #tpu.memory_space<vmem>>, vector<64x128xf32>
    %cst = arith.constant dense<0.000000e+00> : vector<64x128xf32>
    %19 = tpu.matmul %17, %18, %cst {dimension_numbers = #tpu.dot_dimension_numbers<[1], [0], [0], [1], [0, 0, 1, 1], [], []>} : vector<64x64xf32>, vector<64x128xf32>, vector<64x128xf32> -> vector<64x128xf32>
    %c0_12 = arith.constant 0 : index
    %c0_13 = arith.constant 0 : index
    %20 = vector.load %arg6[%c0_12, %c0_13] : memref<64x128xf32, #tpu.memory_space<vmem>>, vector<64x128xf32>
    %cst_14 = arith.constant dense<0.000000e+00> : vector<64x128xf32>
    %21 = tpu.matmul %17, %20, %cst_14 {dimension_numbers = #tpu.dot_dimension_numbers<[1], [0], [0], [1], [0, 0, 1, 1], [], []>} : vector<64x64xf32>, vector<64x128xf32>, vector<64x128xf32> -> vector<64x128xf32>
    %c0_15 = arith.constant 0 : index
    %c0_16 = arith.constant 0 : index
    %22 = vector.load %arg4[%c0_15, %c0_16] : memref<1x128xf32, #tpu.memory_space<vmem>>, vector<1x128xf32>
    %23 = vector.broadcast %22 : vector<1x128xf32> to vector<64x128xf32>
    %24 = arith.mulf %19, %23 : vector<64x128xf32>
    %c0_17 = arith.constant 0 : index
    %c0_18 = arith.constant 0 : index
    %25 = vector.load %arg5[%c0_17, %c0_18] : memref<1x128xf32, #tpu.memory_space<vmem>>, vector<1x128xf32>
    %26 = vector.broadcast %25 : vector<1x128xf32> to vector<64x128xf32>
    %27 = arith.addf %24, %26 : vector<64x128xf32>
    %cst_19 = arith.constant 0.000000e+00 : f32
    %28 = vector.broadcast %cst_19 : f32 to vector<64x128xf32>
    %29 = arith.maximumf %27, %28 : vector<64x128xf32>
    %30 = vector.shape_cast %29 : vector<64x128xf32> to vector<8x8x128xf32>
    %c0_20 = arith.constant 0 : index
    %c0_21 = arith.constant 0 : index
    %c0_22 = arith.constant 0 : index
    %c0_23 = arith.constant 0 : index
    %31 = vector.load %arg9[%c0_20, %c0_21, %c0_22, %c0_23] : memref<1x8x8x128xf32, #tpu.memory_space<vmem>>, vector<1x8x8x128xf32>
    %32 = vector.shape_cast %31 : vector<1x8x8x128xf32> to vector<8x8x128xf32>
    %33 = vector.shape_cast %30 : vector<8x8x128xf32> to vector<1x8x8x128xf32>
    tpu.vector_store %arg9[%c0_20, %c0_21, %c0_22, %c0_23], %33 {strides = array<i32>} : memref<1x8x8x128xf32, #tpu.memory_space<vmem>>, vector<1x8x8x128xf32>,
    %c0_24 = arith.constant 0 : index
    %c0_25 = arith.constant 0 : index
    %34 = vector.load %arg7[%c0_24, %c0_25] : memref<1x128xf32, #tpu.memory_space<vmem>>, vector<1x128xf32>
    %35 = vector.broadcast %34 : vector<1x128xf32> to vector<64x128xf32>
    %36 = arith.mulf %21, %35 : vector<64x128xf32>
    %c0_26 = arith.constant 0 : index
    %c0_27 = arith.constant 0 : index
    %37 = vector.load %arg8[%c0_26, %c0_27] : memref<1x128xf32, #tpu.memory_space<vmem>>, vector<1x128xf32>
    %38 = vector.broadcast %37 : vector<1x128xf32> to vector<64x128xf32>
    %39 = arith.addf %36, %38 : vector<64x128xf32>
    %40 = vector.shape_cast %39 : vector<64x128xf32> to vector<8x8x128xf32>
    %c0_28 = arith.constant 0 : index
    %c0_29 = arith.constant 0 : index
    %c0_30 = arith.constant 0 : index
    %c0_31 = arith.constant 0 : index
    %41 = vector.load %arg10[%c0_28, %c0_29, %c0_30, %c0_31] : memref<1x8x8x128xf32, #tpu.memory_space<vmem>>, vector<1x8x8x128xf32>
    %42 = vector.shape_cast %41 : vector<1x8x8x128xf32> to vector<8x8x128xf32>
    %43 = vector.shape_cast %40 : vector<8x8x128xf32> to vector<1x8x8x128xf32>
    tpu.vector_store %arg10[%c0_28, %c0_29, %c0_30, %c0_31], %43 {strides = array<i32>} : memref<1x8x8x128xf32, #tpu.memory_space<vmem>>, vector<1x8x8x128xf32>,
    return
  }
  func.func @transform_0(%arg0: i32, %arg1: i32) -> (i32, i32, i32, i32) {
    %c0_i32 = arith.constant 0 : i32
    %c0_i32_0 = arith.constant 0 : i32
    %c0_i32_1 = arith.constant 0 : i32
    %c0_i32_2 = arith.constant 0 : i32
    return %arg0, %c0_i32, %c0_i32_0, %c0_i32_1 : i32, i32, i32, i32
  }
  func.func @transform_1(%arg0: i32, %arg1: i32) -> (i32, i32) {
    %c0_i32 = arith.constant 0 : i32
    %c0_i32_0 = arith.constant 0 : i32
    %c0_i32_1 = arith.constant 0 : i32
    return %c0_i32, %c0_i32_0 : i32, i32
  }
  func.func @transform_2(%arg0: i32, %arg1: i32) -> (i32, i32) {
    %c0_i32 = arith.constant 0 : i32
    %c0_i32_0 = arith.constant 0 : i32
    %c0_i32_1 = arith.constant 0 : i32
    return %c0_i32, %c0_i32_0 : i32, i32
  }
  func.func @transform_3(%arg0: i32, %arg1: i32) -> (i32, i32) {
    %c0_i32 = arith.constant 0 : i32
    %c0_i32_0 = arith.constant 0 : i32
    %c0_i32_1 = arith.constant 0 : i32
    return %c0_i32, %c0_i32_0 : i32, i32
  }
  func.func @transform_4(%arg0: i32, %arg1: i32) -> (i32, i32) {
    %c0_i32 = arith.constant 0 : i32
    %c0_i32_0 = arith.constant 0 : i32
    %c0_i32_1 = arith.constant 0 : i32
    return %c0_i32, %c0_i32_0 : i32, i32
  }
  func.func @transform_5(%arg0: i32, %arg1: i32) -> (i32, i32) {
    %c0_i32 = arith.constant 0 : i32
    %c0_i32_0 = arith.constant 0 : i32
    %c0_i32_1 = arith.constant 0 : i32
    return %c0_i32, %c0_i32_0 : i32, i32
  }
  func.func @transform_6(%arg0: i32, %arg1: i32) -> (i32, i32) {
    %c0_i32 = arith.constant 0 : i32
    %c0_i32_0 = arith.constant 0 : i32
    %c0_i32_1 = arith.constant 0 : i32
    return %c0_i32, %c0_i32_0 : i32, i32
  }
  func.func @transform_7(%arg0: i32, %arg1: i32) -> (i32, i32, i32, i32) {
    %c0_i32 = arith.constant 0 : i32
    %c0_i32_0 = arith.constant 0 : i32
    %c0_i32_1 = arith.constant 0 : i32
    return %arg0, %arg1, %c0_i32, %c0_i32_0 : i32, i32, i32, i32
  }
  func.func @transform_8(%arg0: i32, %arg1: i32) -> (i32, i32, i32, i32) {
    %c0_i32 = arith.constant 0 : i32
    %c0_i32_0 = arith.constant 0 : i32
    %c0_i32_1 = arith.constant 0 : i32
    return %arg0, %arg1, %c0_i32, %c0_i32_0 : i32, i32, i32, i32
  }
}

</mosaic_0001>

<llo_original>
// kernel: tpu_custom_call.1
$region0: #{tpu_custom_call.1}
  #allocation0 [shape = 'u32[]', space=smem, size = 0x4, offset = 0x4, fixed_abs, tag = 'smem constant byte address 0x4 - core index']
  #allocation1 [shape = 'u32[72,128]{1,0:T(1,128)}', space=vmem, size = 0x9000, scoped, tag = 'internal scratch']
  #allocation2 [shape = 'f32[9,9,16]{2,1,0:T(8,128)}', space=vmem, size = 0x12000, scoped, tag = 'scratch operand']
  %s0 = inlined_call_operand.hbm [shape: f32[2,8,8,16], index: 0, kind: input, shape index: {}]
  %s1 = inlined_call_operand.hbm [shape: f32[64,128], index: 1, kind: input, shape index: {}]
  %s2 = inlined_call_operand.vmem [shape: f32[1,128], index: 2, kind: input, shape index: {}]
  %s3 = inlined_call_operand.vmem [shape: f32[1,128], index: 3, kind: input, shape index: {}]
  %s4 = inlined_call_operand.hbm [shape: f32[64,128], index: 4, kind: input, shape index: {}]
  %s5 = inlined_call_operand.vmem [shape: f32[1,128], index: 5, kind: input, shape index: {}]
  %s6 = inlined_call_operand.vmem [shape: f32[1,128], index: 6, kind: input, shape index: {}]
  %s7 = inlined_call_operand.hbm [shape: f32[2,8,8,128], index: 7, kind: output, shape index: {0}]
  %s8 = inlined_call_operand.hbm [shape: f32[2,8,8,128], index: 8, kind: output, shape index: {1}]
  %9 = xla_tuple %s7, %s8
  %s10 = sld [smem:[#allocation0]]
  $region85: #{tpu_custom_call.1} parent=0
    _
  %s12 = ssub.s32 1, %s10
  %s13 = scalar_select 0, %s12, %s10
  $region1: #{tpu_custom_call.1} parent=0
    #allocation3 [shape = 'u8[65536]{0}', space=vmem, size = 0x10000, scoped, tag = 'input window, operand 0']
    #allocation4 [shape = 's32[2]{0}', space=sflag, size = 0x8, scoped, tag = 'scoped memory for tpu_custom_call.1']
    #allocation5 [shape = 's32[2]{0}', space=sflag, size = 0x8, scoped, tag = 'scoped memory for tpu_custom_call.1']
    #allocation6 [shape = 'u8[32768]{0}', space=vmem, size = 0x8000, scoped, tag = 'input window, operand 1, single buffered']
    #allocation7 [shape = 's32[1]{0}', space=sflag, size = 0x4, scoped, tag = 'scoped memory for tpu_custom_call.1']
    #allocation8 [shape = 'u8[32768]{0}', space=vmem, size = 0x8000, scoped, tag = 'input window, operand 4, single buffered']
    #allocation9 [shape = 'u8[65536]{0}', space=vmem, size = 0x10000, scoped, tag = 'output window, operand 0']
    #allocation10 [shape = 'u8[65536]{0}', space=vmem, size = 0x10000, scoped, tag = 'output window, operand 1']
    #allocation11 [shape = 's32[2]{0}', space=sflag, size = 0x8, scoped, tag = 'scoped memory for tpu_custom_call.1']
    %14 = vsyncpa [#allocation4], 0
    %s15 = scalar_lea.sflag [#allocation4], 1
    %16 = vsyncpa %s15, 0
    %17 = vsyncpa [#allocation7], 0
    %18 = vsyncpa [#allocation5], 0
    %s19 = scalar_lea.sflag [#allocation5], 1
    %20 = vsyncpa %s19, 0
    %21 = vsyncpa [#allocation11], 0
    %s22 = scalar_lea.sflag [#allocation11], 1
    %23 = vsyncpa %s22, 0
    loop: start=0, step=1, limit=4
    $region2: #{tpu_custom_call.1} parent=1 // loop_pre_header
      _
    $region3: #{tpu_custom_call.1} parent=1 // loop_header
      %s25 = sphi 0, %s29
      %p26 = scmp.ge.s32.totalorder %s25, 4
      %s32 = sphi 0, %s44
      %s33 = sphi 0, %s40
      %s34 = sphi 0, %s32
      %s35 = sphi 0, %s33
      %s36 = sphi 0, %s34
      %s37 = sphi 0, %s35
      %s47 = sphi 0, %s49
      %s50 = sphi 0, %s47
      %s51 = sphi 0, %s50
      %s67 = sphi 0, %s51
      %s71 = sphi 0, %s71
      %s73 = sphi 0, %s71
      %s74 = sphi 0, %s73
      %s88 = sphi 0, %s74
      %s92 = sphi 0, %s92
      %s94 = sphi 0, %s92
      %s95 = sphi 0, %s94
      %s109 = sphi 0, %s95
      %s113 = sphi 0, %s113
      %s115 = sphi 0, %s113
      %s116 = sphi 0, %s115
      %s130 = sphi 0, %s116
      %s134 = sphi 0, %s134
      %s136 = sphi 0, %s134
      %s137 = sphi 0, %s136
      %s151 = sphi 0, %s137
      %s155 = sphi 0, %s155
      %s157 = sphi 0, %s155
      %s158 = sphi 0, %s157
      %s172 = sphi 0, %s158
      %s176 = sphi 0, %s176
      %s178 = sphi 0, %s176
      %s179 = sphi 0, %s178
      %s193 = sphi 0, %s179
      %s201 = sphi 0, %s203
      %s204 = sphi 0, %s201
      %s205 = sphi 0, %s204
      %s221 = sphi 0, %s205
      %s229 = sphi 0, %s231
      %s232 = sphi 0, %s229
      %s233 = sphi 0, %s232
      %s249 = sphi 0, %s233
    $region4: #{tpu_custom_call.1} parent=1 // loop_header_branch
      %28 = sbr.rel (%p26) target = $region8
    $region5: #{tpu_custom_call.1} parent=1 // loop_body
      %s30 = ssub.s32 %s25, 1
      %s31 = ssub.s32 %s25, 2
      %s38 = sadd.s32 1, %s33
      %p39 = scmp.ge.s32.totalorder %s38, 1
      %s40 = scalar_select %p39, 0, %s38
      %s41 = sadd.s32 1, %s32
      %s42 = scalar_select %p39, %s41, %s32
      %p43 = scmp.ge.s32.totalorder %s42, 2
      %s44 = scalar_select %p43, 0, %s42
      %s45 = ssub.s32 %s32, %s44
      %p46 = scmp.eq.s32.totalorder %s45, 0
      %s48 = sadd.s32 %s47, 1
      %s49 = scalar_select %p46, %s47, %s48
      %p52 = pneg %p46
      %p53 = scmp.eq.s32.totalorder %s25, 1
      %p54 = por %p52, %p53
      %p55 = scmp.ne.s32.totalorder %s47, %s50
      %p56 = scmp.eq.s32.totalorder %s25, 0
      %p57 = por %p55, %p56
      %p58 = scmp.ne.s32.totalorder %s47, %s50
      %p59 = scmp.eq.s32.totalorder %s30, 1
      %p60 = por %p58, %p59
      %p61 = scmp.ne.s32.totalorder %s50, %s51
      %p62 = scmp.eq.s32.totalorder %s30, 0
      %p63 = por %p61, %p62
      %p64 = scmp.ne.s32.totalorder %s50, %s51
      %p65 = scmp.eq.s32.totalorder %s31, 1
      %p66 = por %p64, %p65
      %p68 = scmp.ne.s32.totalorder %s51, %s67
      %p69 = scmp.eq.s32.totalorder %s31, 0
      %p70 = por %p68, %p69
      %s72 = sadd.s32 %s71, 1
      %p75 = scmp.eq.s32.totalorder %s25, 1
      %p76 = scmp.ne.s32.totalorder %s71, %s73
      %p77 = scmp.eq.s32.totalorder %s25, 0
      %p78 = por %p76, %p77
      %p79 = scmp.ne.s32.totalorder %s71, %s73
      %p80 = scmp.eq.s32.totalorder %s30, 1
      %p81 = por %p79, %p80
      %p82 = scmp.ne.s32.totalorder %s73, %s74
      %p83 = scmp.eq.s32.totalorder %s30, 0
      %p84 = por %p82, %p83
      %p85 = scmp.ne.s32.totalorder %s73, %s74
      %p86 = scmp.eq.s32.totalorder %s31, 1
      %p87 = por %p85, %p86
      %p89 = scmp.ne.s32.totalorder %s74, %s88
      %p90 = scmp.eq.s32.totalorder %s31, 0
      %p91 = por %p89, %p90
      %s93 = sadd.s32 %s92, 1
      %p96 = scmp.eq.s32.totalorder %s25, 1
      %p97 = scmp.ne.s32.totalorder %s92, %s94
      %p98 = scmp.eq.s32.totalorder %s25, 0
      %p99 = por %p97, %p98
      %p100 = scmp.ne.s32.totalorder %s92, %s94
      %p101 = scmp.eq.s32.totalorder %s30, 1
      %p102 = por %p100, %p101
      %p103 = scmp.ne.s32.totalorder %s94, %s95
      %p104 = scmp.eq.s32.totalorder %s30, 0
      %p105 = por %p103, %p104
      %p106 = scmp.ne.s32.totalorder %s94, %s95
      %p107 = scmp.eq.s32.totalorder %s31, 1
      %p108 = por %p106, %p107
      %p110 = scmp.ne.s32.totalorder %s95, %s109
      %p111 = scmp.eq.s32.totalorder %s31, 0
      %p112 = por %p110, %p111
      %s114 = sadd.s32 %s113, 1
      %p117 = scmp.eq.s32.totalorder %s25, 1
      %p118 = scmp.ne.s32.totalorder %s113, %s115
      %p119 = scmp.eq.s32.totalorder %s25, 0
      %p120 = por %p118, %p119
      %p121 = scmp.ne.s32.totalorder %s113, %s115
      %p122 = scmp.eq.s32.totalorder %s30, 1
      %p123 = por %p121, %p122
      %p124 = scmp.ne.s32.totalorder %s115, %s116
      %p125 = scmp.eq.s32.totalorder %s30, 0
      %p126 = por %p124, %p125
      %p127 = scmp.ne.s32.totalorder %s115, %s116
      %p128 = scmp.eq.s32.totalorder %s31, 1
      %p129 = por %p127, %p128
      %p131 = scmp.ne.s32.totalorder %s116, %s130
      %p132 = scmp.eq.s32.totalorder %s31, 0
      %p133 = por %p131, %p132
      %s135 = sadd.s32 %s134, 1
      %p138 = scmp.eq.s32.totalorder %s25, 1
      %p139 = scmp.ne.s32.totalorder %s134, %s136
      %p140 = scmp.eq.s32.totalorder %s25, 0
      %p141 = por %p139, %p140
      %p142 = scmp.ne.s32.totalorder %s134, %s136
      %p143 = scmp.eq.s32.totalorder %s30, 1
      %p144 = por %p142, %p143
      %p145 = scmp.ne.s32.totalorder %s136, %s137
      %p146 = scmp.eq.s32.totalorder %s30, 0
      %p147 = por %p145, %p146
      %p148 = scmp.ne.s32.totalorder %s136, %s137
      %p149 = scmp.eq.s32.totalorder %s31, 1
      %p150 = por %p148, %p149
      %p152 = scmp.ne.s32.totalorder %s137, %s151
      %p153 = scmp.eq.s32.totalorder %s31, 0
      %p154 = por %p152, %p153
      %s156 = sadd.s32 %s155, 1
      %p159 = scmp.eq.s32.totalorder %s25, 1
      %p160 = scmp.ne.s32.totalorder %s155, %s157
      %p161 = scmp.eq.s32.totalorder %s25, 0
      %p162 = por %p160, %p161
      %p163 = scmp.ne.s32.totalorder %s155, %s157
      %p164 = scmp.eq.s32.totalorder %s30, 1
      %p165 = por %p163, %p164
      %p166 = scmp.ne.s32.totalorder %s157, %s158
      %p167 = scmp.eq.s32.totalorder %s30, 0
      %p168 = por %p166, %p167
      %p169 = scmp.ne.s32.totalorder %s157, %s158
      %p170 = scmp.eq.s32.totalorder %s31, 1
      %p171 = por %p169, %p170
      %p173 = scmp.ne.s32.totalorder %s158, %s172
      %p174 = scmp.eq.s32.totalorder %s31, 0
      %p175 = por %p173, %p174
      %s177 = sadd.s32 %s176, 1
      %p180 = scmp.eq.s32.totalorder %s25, 1
      %p181 = scmp.ne.s32.totalorder %s176, %s178
      %p182 = scmp.eq.s32.totalorder %s25, 0
      %p183 = por %p181, %p182
      %p184 = scmp.ne.s32.totalorder %s176, %s178
      %p185 = scmp.eq.s32.totalorder %s30, 1
      %p186 = por %p184, %p185
      %p187 = scmp.ne.s32.totalorder %s178, %s179
      %p188 = scmp.eq.s32.totalorder %s30, 0
      %p189 = por %p187, %p188
      %p190 = scmp.ne.s32.totalorder %s178, %s179
      %p191 = scmp.eq.s32.totalorder %s31, 1
      %p192 = por %p190, %p191
      %p194 = scmp.ne.s32.totalorder %s179, %s193
      %p195 = scmp.eq.s32.totalorder %s31, 0
      %p196 = por %p194, %p195
      %s197 = ssub.s32 %s32, %s44
      %s198 = ssub.s32 %s33, %s40
      %s199 = sor.u32 %s197, %s198
      %p200 = scmp.eq.s32.totalorder %s199, 0
      %s202 = sadd.s32 %s201, 1
      %s203 = scalar_select %p200, %s201, %s202
      %p206 = pneg %p200
      %p207 = scmp.eq.s32.totalorder %s25, 1
      %p208 = por %p206, %p207
      %p209 = scmp.ne.s32.totalorder %s201, %s204
      %p210 = scmp.eq.s32.totalorder %s25, 0
      %p211 = por %p209, %p210
      %p212 = scmp.ne.s32.totalorder %s201, %s204
      %p213 = scmp.eq.s32.totalorder %s30, 1
      %p214 = por %p212, %p213
      %p215 = scmp.ne.s32.totalorder %s204, %s205
      %p216 = scmp.eq.s32.totalorder %s30, 0
      %p217 = por %p215, %p216
      %p218 = scmp.ne.s32.totalorder %s204, %s205
      %p219 = scmp.eq.s32.totalorder %s31, 1
      %p220 = por %p218, %p219
      %p222 = scmp.ne.s32.totalorder %s205, %s221
      %p223 = scmp.eq.s32.totalorder %s31, 0
      %p224 = por %p222, %p223
      %s225 = ssub.s32 %s32, %s44
      %s226 = ssub.s32 %s33, %s40
      %s227 = sor.u32 %s225, %s226
      %p228 = scmp.eq.s32.totalorder %s227, 0
      %s230 = sadd.s32 %s229, 1
      %s231 = scalar_select %p228, %s229, %s230
      %p234 = pneg %p228
      %p235 = scmp.eq.s32.totalorder %s25, 1
      %p236 = por %p234, %p235
      %p237 = scmp.ne.s32.totalorder %s229, %s232
      %p238 = scmp.eq.s32.totalorder %s25, 0
      %p239 = por %p237, %p238
      %p240 = scmp.ne.s32.totalorder %s229, %s232
      %p241 = scmp.eq.s32.totalorder %s30, 1
      %p242 = por %p240, %p241
      %p243 = scmp.ne.s32.totalorder %s232, %s233
      %p244 = scmp.eq.s32.totalorder %s30, 0
      %p245 = por %p243, %p244
      %p246 = scmp.ne.s32.totalorder %s232, %s233
      %p247 = scmp.eq.s32.totalorder %s31, 1
      %p248 = por %p246, %p247
      %p250 = scmp.ne.s32.totalorder %s233, %s249
      %p251 = scmp.eq.s32.totalorder %s31, 0
      %p252 = por %p250, %p251
      %p253 = scmp.le.s32.totalorder 1, %s25
      %p254 = scmp.lt.s32.totalorder %s25, 3
      %p255 = pnand %p253, %p254
      %p256 = pneg %p255
      // Predicated region
      $region9: #{tpu_custom_call.1} parent=5 // pred_check
        _
      $region10: #{tpu_custom_call.1} parent=5 // pred_check_branch
        %258 = sbr.rel (%p255) target = $region12
      $region11: #{tpu_custom_call.1} parent=5 // pred_region
        %s259 = ssub.s32 %s25, 1
        // Predicated region
        $region13: #{tpu_custom_call.1} parent=11 // pred_check
          %p260 = pneg %p84
        $region14: #{tpu_custom_call.1} parent=11 // pred_check_branch
          %262 = sbr.rel (%p260) target = $region16
        $region15: #{tpu_custom_call.1} parent=11 // pred_region
          %264 = vsyncadd [#allocation7], 0
          %s265 = sshll.u32 %s1, 4
          %s266 = int_to_ptr.hbm [resolvable:$true] %s265
          %s267 = sshll.u32 [#allocation6], 4
          %s268 = int_to_ptr.vmem [resolvable:$true] %s267
          %273 = dma.hbm_to_vmem [thread:$0]  %s266, 1024, %s268, [#allocation7], 128, 128, 8
        $region16: #{tpu_custom_call.1} parent=11 // pred_fallthru
          _
        // Predicated region
        $region17: #{tpu_custom_call.1} parent=11 // pred_check
          %p274 = pneg %p105
        $region18: #{tpu_custom_call.1} parent=11 // pred_check_branch
          %276 = sbr.rel (%p274) target = $region20
        $region19: #{tpu_custom_call.1} parent=11 // pred_region
          _
        $region20: #{tpu_custom_call.1} parent=11 // pred_fallthru
          _
        // Predicated region
        $region21: #{tpu_custom_call.1} parent=11 // pred_check
          %p277 = pneg %p126
        $region22: #{tpu_custom_call.1} parent=11 // pred_check_branch
          %279 = sbr.rel (%p277) target = $region24
        $region23: #{tpu_custom_call.1} parent=11 // pred_region
          _
        $region24: #{tpu_custom_call.1} parent=11 // pred_fallthru
          _
        // Predicated region
        $region25: #{tpu_custom_call.1} parent=11 // pred_check
          %p280 = pneg %p147
        $region26: #{tpu_custom_call.1} parent=11 // pred_check_branch
          %282 = sbr.rel (%p280) target = $region28
        $region27: #{tpu_custom_call.1} parent=11 // pred_region
          %284 = vsyncadd [#allocation7], 0
          %s285 = sshll.u32 %s4, 4
          %s286 = int_to_ptr.hbm [resolvable:$true] %s285
          %s287 = sshll.u32 [#allocation8], 4
          %s288 = int_to_ptr.vmem [resolvable:$true] %s287
          %293 = dma.hbm_to_vmem [thread:$0]  %s286, 1024, %s288, [#allocation7], 128, 128, 8
        $region28: #{tpu_custom_call.1} parent=11 // pred_fallthru
          _
        // Predicated region
        $region29: #{tpu_custom_call.1} parent=11 // pred_check
          %p294 = pneg %p168
        $region30: #{tpu_custom_call.1} parent=11 // pred_check_branch
          %296 = sbr.rel (%p294) target = $region32
        $region31: #{tpu_custom_call.1} parent=11 // pred_region
          _
        $region32: #{tpu_custom_call.1} parent=11 // pred_fallthru
          _
        // Predicated region
        $region33: #{tpu_custom_call.1} parent=11 // pred_check
          %p297 = pneg %p189
        $region34: #{tpu_custom_call.1} parent=11 // pred_check_branch
          %299 = sbr.rel (%p297) target = $region36
        $region35: #{tpu_custom_call.1} parent=11 // pred_region
          _
        $region36: #{tpu_custom_call.1} parent=11 // pred_fallthru
          _
      $region12: #{tpu_custom_call.1} parent=5 // pred_fallthru
        _
      %p300 = scmp.lt.s32.totalorder %s25, 2
      // Predicated region
      $region37: #{tpu_custom_call.1} parent=5 // pred_check
        %p301 = pneg %p300
      $region38: #{tpu_custom_call.1} parent=5 // pred_check_branch
        %303 = sbr.rel (%p301) target = $region40
      $region39: #{tpu_custom_call.1} parent=5 // pred_region
        // Predicated region
        $region41: #{tpu_custom_call.1} parent=39 // pred_check
          %p304 = pneg %p57
        $region42: #{tpu_custom_call.1} parent=39 // pred_check_branch
          %306 = sbr.rel (%p304) target = $region44
        $region43: #{tpu_custom_call.1} parent=39 // pred_region
          %s307 = sand.u32 %s47, 1
          %s308 = scalar_lea.sflag [#allocation4], %s307
          %s309 = sand.u32 %s47, 1
          %s310 = smul.addr %s309, 64
          %s311 = scalar_lea.vmem [#allocation3], %s310
          %313 = vsyncadd %s308, 0
          %s314 = smul.addr %s32, 8
          %s315 = smul.addr %s314, 8
          %s316 = scalar_lea.hbm %s0, %s315
          %s317 = sshll.u32 %s316, 4
          %s318 = int_to_ptr.hbm [resolvable:$true] %s317
          %s319 = sshll.u32 %s311, 4
          %s320 = int_to_ptr.vmem [resolvable:$true] %s319
          %325 = dma.hbm_to_vmem [thread:$0]  %s318, 1024, %s320, %s308, 128, 128, 8
        $region44: #{tpu_custom_call.1} parent=39 // pred_fallthru
          _
      $region40: #{tpu_custom_call.1} parent=5 // pred_fallthru
        _
      %p326 = scmp.le.s32.totalorder 1, %s25
      %p327 = scmp.lt.s32.totalorder %s25, 3
      %p328 = pnand %p326, %p327
      %p329 = pneg %p328
      // Predicated region
      $region45: #{tpu_custom_call.1} parent=5 // pred_check
        _
      $region46: #{tpu_custom_call.1} parent=5 // pred_check_branch
        %331 = sbr.rel (%p328) target = $region48
      $region47: #{tpu_custom_call.1} parent=5 // pred_region
        %s332 = ssub.s32 %s25, 1
        %s333 = sand.u32 %s50, 1
        %s334 = scalar_lea.sflag [#allocation4], %s333
        %s335 = sand.u32 %s50, 1
        %s336 = smul.addr %s335, 64
        %s337 = scalar_lea.vmem [#allocation3], %s336
        // Predicated region
        $region49: #{tpu_custom_call.1} parent=47 // pred_check
          %p338 = pneg %p63
        $region50: #{tpu_custom_call.1} parent=47 // pred_check_branch
          %340 = sbr.rel (%p338) target = $region52
        $region51: #{tpu_custom_call.1} parent=47 // pred_region
          %342 = dma.done %s334, 1024
        $region52: #{tpu_custom_call.1} parent=47 // pred_fallthru
          _
        // Predicated region
        $region53: #{tpu_custom_call.1} parent=47 // pred_check
          %p343 = pneg %p84
        $region54: #{tpu_custom_call.1} parent=47 // pred_check_branch
          %345 = sbr.rel (%p343) target = $region56
        $region55: #{tpu_custom_call.1} parent=47 // pred_region
          %347 = dma.done [#allocation7], 1024
        $region56: #{tpu_custom_call.1} parent=47 // pred_fallthru
          _
        // Predicated region
        $region57: #{tpu_custom_call.1} parent=47 // pred_check
          %p348 = pneg %p147
        $region58: #{tpu_custom_call.1} parent=47 // pred_check_branch
          %350 = sbr.rel (%p348) target = $region60
        $region59: #{tpu_custom_call.1} parent=47 // pred_region
          %352 = dma.done [#allocation7], 1024
        $region60: #{tpu_custom_call.1} parent=47 // pred_fallthru
          _
        %s353 = sand.u32 %s50, 1
        %s354 = scalar_lea.sflag [#allocation4], %s353
        %s355 = sand.u32 %s50, 1
        %s356 = smul.addr %s355, 64
        %s357 = scalar_lea.vmem [#allocation3], %s356
        %p358 = pneg %p63
        %p359 = pneg %p60
        %p360 = pneg %p84
        %p361 = pneg %p81
        %p362 = pneg %p105
        %p363 = pneg %p102
        %p364 = pneg %p126
        %p365 = pneg %p123
        %p366 = pneg %p147
        %p367 = pneg %p144
        %p368 = pneg %p168
        %p369 = pneg %p165
        %p370 = pneg %p189
        %p371 = pneg %p186
        %p372 = pneg %p217
        %p373 = pneg %p214
        %s374 = sand.u32 %s204, 1
        %s375 = scalar_lea.sflag [#allocation5], %s374
        %s376 = sand.u32 %s204, 1
        %s377 = smul.addr %s376, 64
        %s378 = scalar_lea.vmem [#allocation9], %s377
        %p379 = pneg %p245
        %p380 = pneg %p242
        %s381 = sand.u32 %s232, 1
        %s382 = scalar_lea.sflag [#allocation11], %s381
        %s383 = sand.u32 %s232, 1
        %s384 = smul.addr %s383, 64
        %s385 = scalar_lea.vmem [#allocation10], %s384
        %s386 = smul.u32 8, %s35
        %s387 = smul.u32 8, %s35
        %p388 = scmp.eq.s32.totalorder %s35, 0
        // Predicated region
        $region61: #{tpu_custom_call.1} parent=47 // pred_check
          %p389 = pneg %p388
        $region62: #{tpu_custom_call.1} parent=47 // pred_check_branch
          %391 = sbr.rel (%p389) target = $region64
        $region63: #{tpu_custom_call.1} parent=47 // pred_region
          %vm392 = vcmask 130048
          %393 = vst.msk [vmem:[#allocation2] sm:$0xff] %vm392, 0.0
          %vm394 = vcmask 122880
          %395 = vst.msk [vmem:[#allocation2 + $0x8] sm:$0x1] %vm394, 0.0
          %396 = vst.msk [vmem:[#allocation2] sm:$0x1] %vm394, 0.0
          %397 = vst.msk [vmem:[#allocation2 + $0x10] sm:$0x1] %vm394, 0.0
          %398 = vst.msk [vmem:[#allocation2 + $0x20] sm:$0x1] %vm394, 0.0
          %399 = vst.msk [vmem:[#allocation2 + $0x30] sm:$0x1] %vm394, 0.0
          %400 = vst.msk [vmem:[#allocation2 + $0x40] sm:$0x1] %vm394, 0.0
          %401 = vst.msk [vmem:[#allocation2 + $0x50] sm:$0x1] %vm394, 0.0
          %402 = vst.msk [vmem:[#allocation2 + $0x60] sm:$0x1] %vm394, 0.0
          %403 = vst.msk [vmem:[#allocation2 + $0x70] sm:$0x1] %vm394, 0.0
          %404 = vst.msk [vmem:[#allocation2 + $0x80] sm:$0x1] %vm394, 0.0
          %v405 = vld [vmem:[%s337] sm:$0xff]
          %v406 = vld [vmem:[%s337 + $0x8] sm:$0xff]
          %v407 = vld [vmem:[%s337 + $0x10] sm:$0xff]
          %v408 = vld [vmem:[%s337 + $0x18] sm:$0xff]
          %v409 = vld [vmem:[%s337 + $0x20] sm:$0xff]
          %v410 = vld [vmem:[%s337 + $0x28] sm:$0xff]
          %v411 = vld [vmem:[%s337 + $0x30] sm:$0xff]
          %v412 = vld [vmem:[%s337 + $0x38] sm:$0xff]
          %s413 = scalar_lea.vmem [#allocation2], 16
          %414 = vst.msk [vmem:[%s413 + $0x1] sm:$0xff] %vm392, %v405
          %415 = vst.msk [vmem:[%s413 + $0x11] sm:$0xff] %vm392, %v406
          %416 = vst.msk [vmem:[%s413 + $0x21] sm:$0xff] %vm392, %v407
          %417 = vst.msk [vmem:[%s413 + $0x31] sm:$0xff] %vm392, %v408
          %418 = vst.msk [vmem:[%s413 + $0x41] sm:$0xff] %vm392, %v409
          %419 = vst.msk [vmem:[%s413 + $0x51] sm:$0xff] %vm392, %v410
          %420 = vst.msk [vmem:[%s413 + $0x61] sm:$0xff] %vm392, %v411
          %421 = vst.msk [vmem:[%s413 + $0x71] sm:$0xff] %vm392, %v412
        $region64: #{tpu_custom_call.1} parent=47 // pred_fallthru
          _
        %s422 = smul.u32 %s35, 8
        %s423 = smul.u32 %s422, 16
        %s424 = scalar_lea.vmem [#allocation2], %s423
        %v425 = vld [vmem:[%s424] sm:$0xff]
        %v426 = vld [vmem:[%s424 + $0x10] sm:$0xff]
        %v427 = vld [vmem:[%s424 + $0x20] sm:$0xff]
        %v428 = vld [vmem:[%s424 + $0x30] sm:$0xff]
        %v429 = vld [vmem:[%s424 + $0x40] sm:$0xff]
        %v430 = vld [vmem:[%s424 + $0x50] sm:$0xff]
        %v431 = vld [vmem:[%s424 + $0x60] sm:$0xff]
        %v432 = vld [vmem:[%s424 + $0x70] sm:$0xff]
        %v433 = vld [vmem:[%s424 + $0x1] sm:$0xff]
        %v434 = vld [vmem:[%s424 + $0x11] sm:$0xff]
        %v435 = vld [vmem:[%s424 + $0x21] sm:$0xff]
        %v436 = vld [vmem:[%s424 + $0x31] sm:$0xff]
        %v437 = vld [vmem:[%s424 + $0x41] sm:$0xff]
        %v438 = vld [vmem:[%s424 + $0x51] sm:$0xff]
        %v439 = vld [vmem:[%s424 + $0x61] sm:$0xff]
        %v440 = vld [vmem:[%s424 + $0x71] sm:$0xff]
        %s441 = sadd.s32 %s422, 1
        %s442 = smul.u32 %s441, 16
        %s443 = scalar_lea.vmem [#allocation2], %s442
        %v444 = vld [vmem:[%s443] sm:$0xff]
        %v445 = vld [vmem:[%s443 + $0x10] sm:$0xff]
        %v446 = vld [vmem:[%s443 + $0x20] sm:$0xff]
        %v447 = vld [vmem:[%s443 + $0x30] sm:$0xff]
        %v448 = vld [vmem:[%s443 + $0x40] sm:$0xff]
        %v449 = vld [vmem:[%s443 + $0x50] sm:$0xff]
        %v450 = vld [vmem:[%s443 + $0x60] sm:$0xff]
        %v451 = vld [vmem:[%s443 + $0x70] sm:$0xff]
        %v452 = vld [vmem:[%s443 + $0x1] sm:$0xff]
        %v453 = vld [vmem:[%s443 + $0x11] sm:$0xff]
        %v454 = vld [vmem:[%s443 + $0x21] sm:$0xff]
        %v455 = vld [vmem:[%s443 + $0x31] sm:$0xff]
        %v456 = vld [vmem:[%s443 + $0x41] sm:$0xff]
        %v457 = vld [vmem:[%s443 + $0x51] sm:$0xff]
        %v458 = vld [vmem:[%s443 + $0x61] sm:$0xff]
        %v459 = vld [vmem:[%s443 + $0x71] sm:$0xff]
        %468 = vrot.lane.b32.xlu0 %v433, 16
        %v469 = vpop.permute.xlu0 %468
        %470 = vrot.lane.b32.xlu0 %v434, 16
        %v471 = vpop.permute.xlu0 %470
        %472 = vrot.lane.b32.xlu0 %v435, 16
        %v473 = vpop.permute.xlu0 %472
        %474 = vrot.lane.b32.xlu0 %v436, 16
        %v475 = vpop.permute.xlu0 %474
        %476 = vrot.lane.b32.xlu0 %v437, 16
        %v477 = vpop.permute.xlu0 %476
        %478 = vrot.lane.b32.xlu0 %v438, 16
        %v479 = vpop.permute.xlu0 %478
        %480 = vrot.lane.b32.xlu0 %v439, 16
        %v481 = vpop.permute.xlu0 %480
        %482 = vrot.lane.b32.xlu0 %v440, 16
        %v483 = vpop.permute.xlu0 %482
        %500 = vrot.lane.b32.xlu0 %v444, 32
        %v501 = vpop.permute.xlu0 %500
        %502 = vrot.lane.b32.xlu0 %v445, 32
        %v503 = vpop.permute.xlu0 %502
        %504 = vrot.lane.b32.xlu0 %v446, 32
        %v505 = vpop.permute.xlu0 %504
        %506 = vrot.lane.b32.xlu0 %v447, 32
        %v507 = vpop.permute.xlu0 %506
        %508 = vrot.lane.b32.xlu0 %v448, 32
        %v509 = vpop.permute.xlu0 %508
        %510 = vrot.lane.b32.xlu0 %v449, 32
        %v511 = vpop.permute.xlu0 %510
        %512 = vrot.lane.b32.xlu0 %v450, 32
        %v513 = vpop.permute.xlu0 %512
        %514 = vrot.lane.b32.xlu0 %v451, 32
        %v515 = vpop.permute.xlu0 %514
        %532 = vrot.lane.b32.xlu0 %v452, 48
        %v533 = vpop.permute.xlu0 %532
        %534 = vrot.lane.b32.xlu0 %v453, 48
        %v535 = vpop.permute.xlu0 %534
        %536 = vrot.lane.b32.xlu0 %v454, 48
        %v537 = vpop.permute.xlu0 %536
        %538 = vrot.lane.b32.xlu0 %v455, 48
        %v539 = vpop.permute.xlu0 %538
        %540 = vrot.lane.b32.xlu0 %v456, 48
        %v541 = vpop.permute.xlu0 %540
        %542 = vrot.lane.b32.xlu0 %v457, 48
        %v543 = vpop.permute.xlu0 %542
        %544 = vrot.lane.b32.xlu0 %v458, 48
        %v545 = vpop.permute.xlu0 %544
        %546 = vrot.lane.b32.xlu0 %v459, 48
        %v547 = vpop.permute.xlu0 %546
        %vm556 = vcmask 130048
        %v557 = vsel %vm556, %v425, %v469
        %v558 = vsel %vm556, %v426, %v471
        %v559 = vsel %vm556, %v427, %v473
        %v560 = vsel %vm556, %v428, %v475
        %v561 = vsel %vm556, %v429, %v477
        %v562 = vsel %vm556, %v430, %v479
        %v563 = vsel %vm556, %v431, %v481
        %v564 = vsel %vm556, %v432, %v483
        %vm565 = vcmask 261120
        %v566 = vsel %vm565, %v557, %v501
        %v567 = vsel %vm565, %v558, %v503
        %v568 = vsel %vm565, %v559, %v505
        %v569 = vsel %vm565, %v560, %v507
        %v570 = vsel %vm565, %v561, %v509
        %v571 = vsel %vm565, %v562, %v511
        %v572 = vsel %vm565, %v563, %v513
        %v573 = vsel %vm565, %v564, %v515
        %vm574 = vcmask 392192
        %v575 = vsel %vm574, %v566, %v533
        %v576 = vsel %vm574, %v567, %v535
        %v577 = vsel %vm574, %v568, %v537
        %v578 = vsel %vm574, %v569, %v539
        %v579 = vsel %vm574, %v570, %v541
        %v580 = vsel %vm574, %v571, %v543
        %v581 = vsel %vm574, %v572, %v545
        %v582 = vsel %vm574, %v573, %v547
        %v583 = vld [vmem:[#allocation6] sm:$0xff]
        %v584 = vld [vmem:[#allocation6 + $0x8] sm:$0xff]
        %v585 = vld [vmem:[#allocation6 + $0x10] sm:$0xff]
        %v586 = vld [vmem:[#allocation6 + $0x18] sm:$0xff]
        %v587 = vld [vmem:[#allocation6 + $0x20] sm:$0xff]
        %v588 = vld [vmem:[#allocation6 + $0x28] sm:$0xff]
        %v589 = vld [vmem:[#allocation6 + $0x30] sm:$0xff]
        %v590 = vld [vmem:[#allocation6 + $0x38] sm:$0xff]
        %vm591 = vcmask 523264
        %v593 = vsel %vm591, %v575, 0
        %v596 = vsel %vm591, %v576, 0
        %v599 = vsel %vm591, %v577, 0
        %v602 = vsel %vm591, %v578, 0
        %v605 = vsel %vm591, %v579, 0
        %v608 = vsel %vm591, %v580, 0
        %v611 = vsel %vm591, %v581, 0
        %v614 = vsel %vm591, %v582, 0
        %616 = vmatpush.msra.mxu0 0.0
        %617 = vmatpush.msra.mxu0 0.0
        %618 = vmatpush.msra.mxu0 0.0
        %619 = vmatpush.msra.mxu0 0.0
        %620 = vmatpush.msra.mxu0 0.0
        %621 = vmatpush.msra.mxu0 0.0
        %622 = vmatpush.msra.mxu0 0.0
        %623 = vmatpush.msra.mxu0 0.0
        %624 = vmatpush.msra.mxu0 %v590
        %625 = vmatpush.msra.mxu0 %v589
        %626 = vmatpush.msra.mxu0 %v588
        %627 = vmatpush.msra.mxu0 %v587
        %628 = vmatpush.msra.mxu0 %v586
        %629 = vmatpush.msra.mxu0 %v585
        %630 = vmatpush.msra.mxu0 %v584
        %631 = vmatpush.msra.mxu0 %v583
        %632 = vmatmul.f32.gmra.mxu0 %v593
        %v633 = vpop.f32.mrf.mxu0
        %v634 = vadd.f32 0.0, %v633
        %635 = vmatmul.f32.gmra.mxu0 %v596
        %v636 = vpop.f32.mrf.mxu0
        %v637 = vadd.f32 0.0, %v636
        %638 = vmatmul.f32.gmra.mxu0 %v599
        %v639 = vpop.f32.mrf.mxu0
        %v640 = vadd.f32 0.0, %v639
        %641 = vmatmul.f32.gmra.mxu0 %v602
        %v642 = vpop.f32.mrf.mxu0
        %v643 = vadd.f32 0.0, %v642
        %644 = vmatmul.f32.gmra.mxu0 %v605
        %v645 = vpop.f32.mrf.mxu0
        %v646 = vadd.f32 0.0, %v645
        %647 = vmatmul.f32.gmra.mxu0 %v608
        %v648 = vpop.f32.mrf.mxu0
        %v649 = vadd.f32 0.0, %v648
        %650 = vmatmul.f32.gmra.mxu0 %v611
        %v651 = vpop.f32.mrf.mxu0
        %v652 = vadd.f32 0.0, %v651
        %653 = vmatmul.f32.gmra.mxu0 %v614
        %v654 = vpop.f32.mrf.mxu0
        %v655 = vadd.f32 0.0, %v654
        %656 = vdwg.mxu0
        %v657 = vld [vmem:[#allocation8] sm:$0xff]
        %v658 = vld [vmem:[#allocation8 + $0x8] sm:$0xff]
        %v659 = vld [vmem:[#allocation8 + $0x10] sm:$0xff]
        %v660 = vld [vmem:[#allocation8 + $0x18] sm:$0xff]
        %v661 = vld [vmem:[#allocation8 + $0x20] sm:$0xff]
        %v662 = vld [vmem:[#allocation8 + $0x28] sm:$0xff]
        %v663 = vld [vmem:[#allocation8 + $0x30] sm:$0xff]
        %v664 = vld [vmem:[#allocation8 + $0x38] sm:$0xff]
        %665 = vmatpush.msra.mxu0 0.0
        %666 = vmatpush.msra.mxu0 0.0
        %667 = vmatpush.msra.mxu0 0.0
        %668 = vmatpush.msra.mxu0 0.0
        %669 = vmatpush.msra.mxu0 0.0
        %670 = vmatpush.msra.mxu0 0.0
        %671 = vmatpush.msra.mxu0 0.0
        %672 = vmatpush.msra.mxu0 0.0
        %673 = vmatpush.msra.mxu0 %v664
        %674 = vmatpush.msra.mxu0 %v663
        %675 = vmatpush.msra.mxu0 %v662
        %676 = vmatpush.msra.mxu0 %v661
        %677 = vmatpush.msra.mxu0 %v660
        %678 = vmatpush.msra.mxu0 %v659
        %679 = vmatpush.msra.mxu0 %v658
        %680 = vmatpush.msra.mxu0 %v657
        %681 = vmatmul.f32.gmra.mxu0 %v593
        %v682 = vpop.f32.mrf.mxu0
        %v683 = vadd.f32 0.0, %v682
        %684 = vmatmul.f32.gmra.mxu0 %v596
        %v685 = vpop.f32.mrf.mxu0
        %v686 = vadd.f32 0.0, %v685
        %687 = vmatmul.f32.gmra.mxu0 %v599
        %v688 = vpop.f32.mrf.mxu0
        %v689 = vadd.f32 0.0, %v688
        %690 = vmatmul.f32.gmra.mxu0 %v602
        %v691 = vpop.f32.mrf.mxu0
        %v692 = vadd.f32 0.0, %v691
        %693 = vmatmul.f32.gmra.mxu0 %v605
        %v694 = vpop.f32.mrf.mxu0
        %v695 = vadd.f32 0.0, %v694
        %696 = vmatmul.f32.gmra.mxu0 %v608
        %v697 = vpop.f32.mrf.mxu0
        %v698 = vadd.f32 0.0, %v697
        %699 = vmatmul.f32.gmra.mxu0 %v611
        %v700 = vpop.f32.mrf.mxu0
        %v701 = vadd.f32 0.0, %v700
        %702 = vmatmul.f32.gmra.mxu0 %v614
        %v703 = vpop.f32.mrf.mxu0
        %v704 = vadd.f32 0.0, %v703
        %705 = vdwg.mxu0
        %v706 = vld [vmem:[%s2] sm:$0x1]
        %v708 = vperm.slane %v706, 0
        %v710 = vmul.f32 %v634, %v708
        %v711 = vmul.f32 %v637, %v708
        %v712 = vmul.f32 %v640, %v708
        %v713 = vmul.f32 %v643, %v708
        %v714 = vmul.f32 %v646, %v708
        %v715 = vmul.f32 %v649, %v708
        %v716 = vmul.f32 %v652, %v708
        %v717 = vmul.f32 %v655, %v708
        %v718 = vld [vmem:[%s3] sm:$0x1]
        %v720 = vperm.slane %v718, 0
        %v722 = vadd.f32 %v710, %v720
        %v723 = vadd.f32 %v711, %v720
        %v724 = vadd.f32 %v712, %v720
        %v725 = vadd.f32 %v713, %v720
        %v726 = vadd.f32 %v714, %v720
        %v727 = vadd.f32 %v715, %v720
        %v728 = vadd.f32 %v716, %v720
        %v729 = vadd.f32 %v717, %v720
        %v730 = vmax.f32 %v722, 0.0
        %v731 = vmax.f32 %v723, 0.0
        %v732 = vmax.f32 %v724, 0.0
        %v733 = vmax.f32 %v725, 0.0
        %v734 = vmax.f32 %v726, 0.0
        %v735 = vmax.f32 %v727, 0.0
        %v736 = vmax.f32 %v728, 0.0
        %v737 = vmax.f32 %v729, 0.0
        %738 = vst [vmem:[%s378] sm:$0xff] %v730
        %739 = vst [vmem:[%s378 + $0x8] sm:$0xff] %v731
        %740 = vst [vmem:[%s378 + $0x10] sm:$0xff] %v732
        %741 = vst [vmem:[%s378 + $0x18] sm:$0xff] %v733
        %742 = vst [vmem:[%s378 + $0x20] sm:$0xff] %v734
        %743 = vst [vmem:[%s378 + $0x28] sm:$0xff] %v735
        %744 = vst [vmem:[%s378 + $0x30] sm:$0xff] %v736
        %745 = vst [vmem:[%s378 + $0x38] sm:$0xff] %v737
        %v746 = vld [vmem:[%s5] sm:$0x1]
        %v748 = vperm.slane %v746, 0
        %v750 = vmul.f32 %v683, %v748
        %v751 = vmul.f32 %v686, %v748
        %v752 = vmul.f32 %v689, %v748
        %v753 = vmul.f32 %v692, %v748
        %v754 = vmul.f32 %v695, %v748
        %v755 = vmul.f32 %v698, %v748
        %v756 = vmul.f32 %v701, %v748
        %v757 = vmul.f32 %v704, %v748
        %v758 = vld [vmem:[%s6] sm:$0x1]
        %v760 = vperm.slane %v758, 0
        %v762 = vadd.f32 %v750, %v760
        %v763 = vadd.f32 %v751, %v760
        %v764 = vadd.f32 %v752, %v760
        %v765 = vadd.f32 %v753, %v760
        %v766 = vadd.f32 %v754, %v760
        %v767 = vadd.f32 %v755, %v760
        %v768 = vadd.f32 %v756, %v760
        %v769 = vadd.f32 %v757, %v760
        %770 = vst [vmem:[%s385] sm:$0xff] %v762
        %771 = vst [vmem:[%s385 + $0x8] sm:$0xff] %v763
        %772 = vst [vmem:[%s385 + $0x10] sm:$0xff] %v764
        %773 = vst [vmem:[%s385 + $0x18] sm:$0xff] %v765
        %774 = vst [vmem:[%s385 + $0x20] sm:$0xff] %v766
        %775 = vst [vmem:[%s385 + $0x28] sm:$0xff] %v767
        %776 = vst [vmem:[%s385 + $0x30] sm:$0xff] %v768
        %777 = vst [vmem:[%s385 + $0x38] sm:$0xff] %v769
        %s778 = sand.u32 %s204, 1
        %s779 = scalar_lea.sflag [#allocation5], %s778
        %s780 = sand.u32 %s204, 1
        %s781 = smul.addr %s780, 64
        %s782 = scalar_lea.vmem [#allocation9], %s781
        %s783 = sand.u32 %s232, 1
        %s784 = scalar_lea.sflag [#allocation11], %s783
        %s785 = sand.u32 %s232, 1
        %s786 = smul.addr %s785, 64
        %s787 = scalar_lea.vmem [#allocation10], %s786
        // Predicated region
        $region65: #{tpu_custom_call.1} parent=47 // pred_check
          %p788 = pneg %p214
        $region66: #{tpu_custom_call.1} parent=47 // pred_check_branch
          %790 = sbr.rel (%p788) target = $region68
        $region67: #{tpu_custom_call.1} parent=47 // pred_region
          %s791 = smul.u32 8, %s35
          %793 = vsyncadd %s779, 0
          %s794 = smul.addr %s34, 8
          %s795 = sadd.s32 %s791, %s794
          %s796 = smul.addr %s795, 8
          %s797 = scalar_lea.hbm %s7, %s796
          %s798 = sshll.u32 %s782, 4
          %s799 = int_to_ptr.vmem [resolvable:$true] %s798
          %s800 = sshll.u32 %s797, 4
          %s801 = int_to_ptr.hbm [resolvable:$true] %s800
          %806 = dma.vmem_to_hbm [thread:$0]  %s799, 1024, %s801, %s779, 128, 128, 8
        $region68: #{tpu_custom_call.1} parent=47 // pred_fallthru
          _
        // Predicated region
        $region69: #{tpu_custom_call.1} parent=47 // pred_check
          %p807 = pneg %p242
        $region70: #{tpu_custom_call.1} parent=47 // pred_check_branch
          %809 = sbr.rel (%p807) target = $region72
        $region71: #{tpu_custom_call.1} parent=47 // pred_region
          %s810 = smul.u32 8, %s35
          %812 = vsyncadd %s784, 0
          %s813 = smul.addr %s34, 8
          %s814 = sadd.s32 %s810, %s813
          %s815 = smul.addr %s814, 8
          %s816 = scalar_lea.hbm %s8, %s815
          %s817 = sshll.u32 %s787, 4
          %s818 = int_to_ptr.vmem [resolvable:$true] %s817
          %s819 = sshll.u32 %s816, 4
          %s820 = int_to_ptr.hbm [resolvable:$true] %s819
          %825 = dma.vmem_to_hbm [thread:$0]  %s818, 1024, %s820, %s784, 128, 128, 8
        $region72: #{tpu_custom_call.1} parent=47 // pred_fallthru
          _
      $region48: #{tpu_custom_call.1} parent=5 // pred_fallthru
        _
      %p826 = scmp.le.s32.totalorder 2, %s25
      // Predicated region
      $region73: #{tpu_custom_call.1} parent=5 // pred_check
        %p827 = pneg %p826
      $region74: #{tpu_custom_call.1} parent=5 // pred_check_branch
        %829 = sbr.rel (%p827) target = $region76
      $region75: #{tpu_custom_call.1} parent=5 // pred_region
        %s830 = ssub.s32 %s25, 2
        // Predicated region
        $region77: #{tpu_custom_call.1} parent=75 // pred_check
          %p831 = pneg %p220
        $region78: #{tpu_custom_call.1} parent=75 // pred_check_branch
          %833 = sbr.rel (%p831) target = $region80
        $region79: #{tpu_custom_call.1} parent=75 // pred_region
          %s834 = sand.u32 %s205, 1
          %s835 = scalar_lea.sflag [#allocation5], %s834
          %s836 = sand.u32 %s205, 1
          %s837 = smul.addr %s836, 64
          %s838 = scalar_lea.vmem [#allocation9], %s837
          %840 = dma.done %s835, 1024
        $region80: #{tpu_custom_call.1} parent=75 // pred_fallthru
          _
        // Predicated region
        $region81: #{tpu_custom_call.1} parent=75 // pred_check
          %p841 = pneg %p248
        $region82: #{tpu_custom_call.1} parent=75 // pred_check_branch
          %843 = sbr.rel (%p841) target = $region84
        $region83: #{tpu_custom_call.1} parent=75 // pred_region
          %s844 = sand.u32 %s233, 1
          %s845 = scalar_lea.sflag [#allocation11], %s844
          %s846 = sand.u32 %s233, 1
          %s847 = smul.addr %s846, 64
          %s848 = scalar_lea.vmem [#allocation10], %s847
          %850 = dma.done %s845, 1024
        $region84: #{tpu_custom_call.1} parent=75 // pred_fallthru
          _
      $region76: #{tpu_custom_call.1} parent=5 // pred_fallthru
        _
    $region6: #{tpu_custom_call.1} parent=1 // loop_footer
      %s29 = sadd.s32 1, %s25
    $region7: #{tpu_custom_call.1} parent=1 // loop_footer_branch
      %24 = sbr.rel target = $region3
    $region8: #{tpu_custom_call.1} parent=1 // loop_exit
      _
    %851 = vsyncpa [#allocation4], 1
    %s852 = scalar_lea.sflag [#allocation4], 1
    %853 = vsyncpa %s852, 1
    %854 = vsyncpa [#allocation7], 1
    %855 = vsyncpa [#allocation5], 1
    %s856 = scalar_lea.sflag [#allocation5], 1
    %857 = vsyncpa %s856, 1
    %858 = vsyncpa [#allocation11], 1
    %s859 = scalar_lea.sflag [#allocation11], 1
    %860 = vsyncpa %s859, 1

</llo_original>
